<compile_context>
chip_gen: v6e
topology: v6e:2x2x1
jax: 0.10.0
libtpu: 0.0.40
codegen_flags: <defaults>
</compile_context>

<pallas_src>
import functools

import jax
import jax.numpy as jnp
from jax.experimental import pallas as pl
from jax.experimental.pallas import tpu as pltpu


# ------------------------------- helpers -------------------------------------

def _round_up(x, m):
    return ((x + m - 1) // m) * m


def _device_config():
    """Per-TPU-generation tiling + VMEM budget (evaluated once at trace time)."""
    kind = ""
    try:
        kind = jax.devices()[0].device_kind.lower()
    except Exception:
        pass
    vmem = None
    try:
        vmem = int(pltpu.get_tpu_info().vmem_capacity_bytes)
    except Exception:
        vmem = None
    if vmem is None:
        vmem = 64 * 2**20 if "v7" in kind else 128 * 2**20

    if "v7" in kind or vmem <= 64 * 2**20:
        # v7x: 64 MiB VMEM per TC, ridge ~310 flops/byte, 2 TensorCores.
        return dict(tm=512, ti=256,
                    vmem_cap=int(min(max(vmem - 8 * 2**20, 32 * 2**20),
                                     56 * 2**20)),
                    two_cores=True)
    if "v6" in kind:
        # v6e: 128 MiB VMEM, ridge ~680 flops/byte -> big row tiles.
        return dict(tm=1024, ti=512, vmem_cap=100 * 2**20, two_cores=False)
    if "v5" in kind:
        # v5e: ridge ~240 flops/byte; keep clean 128-multiples for the MXU.
        return dict(tm=384, ti=512, vmem_cap=100 * 2**20, two_cores=False)
    # Unknown TPU: conservative middle ground.
    return dict(tm=512, ti=512,
                vmem_cap=int(min(vmem * 3 // 4, 96 * 2**20)), two_cores=False)


# ----------------------------- Pallas kernel ---------------------------------

def _mlp_kernel(x_ref, wgu_ref, wd_ref, o_ref, *, ti):
    """One (tm, H) row-block of  down( SiLU(gate(x)) * up(x) ).

    Grid: (M // tm, Ip // ti); axis 1 (intermediate dim) is the reduction axis.
    Matmuls run in bf16 on the MXU with f32 accumulation; the partial
    down-projection is accumulated directly into the resident f32 output
    block (same output block index across the reduction axis).
    """
    k = pl.program_id(1)

    # Activation cast fused into the kernel (x stays f32 in HBM).
    x = x_ref[...].astype(wgu_ref.dtype)                       # (tm, H) bf16
    # Fused gate|up projection: single (tm, H) @ (H, 2*ti) matmul.
    gu = jnp.dot(x, wgu_ref[...], preferred_element_type=jnp.float32)
    gate = gu[:, :ti]
    up = gu[:, ti:]
    h = (gate * jax.nn.sigmoid(gate)) * up                     # f32 SwiGLU
    partial = jnp.dot(h.astype(wd_ref.dtype), wd_ref[...],
                      preferred_element_type=jnp.float32)      # (tm, H) f32

    @pl.when(k == 0)
    def _():
        o_ref[...] = partial

    @pl.when(k > 0)
    def _():
        o_ref[...] += partial


# ------------------------------ weight prep ----------------------------------

def prepare_qwen2_mlp_params(params, *, use_lora, r=8, lora_alpha=32,
                             ti=None, weight_dtype=jnp.bfloat16):
    """ONE-TIME (load-time) weight preparation.  Do NOT call per forward.

    params use PyTorch nn.Linear convention (out_features, in_features):
        gate_w (I,H), up_w (I,H), down_w (H,I),
        gate_A (r,H), gate_B (I,r), up_A (r,H), up_B (I,r)  [if use_lora]
    """
    cfg = _device_config()
    if ti is None:
        ti = cfg["ti"]

    gate_w = jnp.asarray(params["gate_w"], jnp.float32)        # (I, H)
    up_w = jnp.asarray(params["up_w"], jnp.float32)            # (I, H)
    down_w = jnp.asarray(params["down_w"], jnp.float32)        # (H, I)

    if use_lora:
        scaling = float(lora_alpha) / float(r)
        # Frozen-weight forward:  x@W^T + s*(x@A^T@B^T)  ==  x@(W + s*B@A)^T.
        gate_w = gate_w + scaling * (jnp.asarray(params["gate_B"], jnp.float32)
                                     @ jnp.asarray(params["gate_A"], jnp.float32))
        up_w = up_w + scaling * (jnp.asarray(params["up_B"], jnp.float32)
                                 @ jnp.asarray(params["up_A"], jnp.float32))

    I, H = gate_w.shape
    ti = int(min(ti, _round_up(I, 128)))
    Ip = _round_up(I, ti)                                      # zero-pad I
    nk = Ip // ti
    pad = Ip - I

    gate_t = gate_w.T                                          # (H, I)
    up_t = up_w.T                                              # (H, I)
    down_t = down_w.T                                          # (I, H)
    if pad:
        # Zero-padding I is exact: silu(0)*0 = 0 and zero down-rows add 0.
        gate_t = jnp.pad(gate_t, ((0, 0), (0, pad)))
        up_t = jnp.pad(up_t, ((0, 0), (0, pad)))
        down_t = jnp.pad(down_t, ((0, pad), (0, 0)))

    # Tile-major layout: one contiguous (H, 2*ti) gate|up slab per k-step.
    wgu = jnp.concatenate(
        [gate_t.reshape(H, nk, ti), up_t.reshape(H, nk, ti)], axis=2
    )                                                          # (H, nk, 2*ti)
    wgu = jnp.transpose(wgu, (1, 0, 2)).astype(weight_dtype)   # (nk, H, 2*ti)
    wd = down_t.reshape(nk, ti, H).astype(weight_dtype)        # (nk, ti, H)

    return {"wgu": wgu, "wd": wd, "hidden": H, "intermediate": I,
            "intermediate_padded": Ip, "ti": ti, "nk": nk}


# -------------------------------- forward ------------------------------------

def qwen2_mlp(x, prepped, *, tm=None):
    """x: (B, S, H) float32.  prepped: output of prepare_qwen2_mlp_params."""
    cfg = _device_config()
    B, S, H = x.shape
    assert H == prepped["hidden"]
    Ip, ti, nk = prepped["intermediate_padded"], prepped["ti"], prepped["nk"]
    M = B * S

    # Row-tile selection: tm is the arithmetic-intensity lever (weights are
    # re-streamed once per row tile), so keep it as large as the per-gen VMEM
    # budget allows; pad M instead of picking ragged divisors.
    if tm is None:
        tm = cfg["tm"]
    if M >= 128:
        tm = min(tm, _round_up(M, 128))
        tm = max(128, (tm // 128) * 128)
    else:
        tm = _round_up(M, 8)
    Mp = _round_up(M, tm)
    nm = Mp // tm
    # v7x megacore: make sure both TensorCores get at least one row tile.
    if cfg["two_cores"] and nm < 2 and Mp >= 256:
        tm = max(128, ((Mp // 2) // 128) * 128)
        Mp = _round_up(M, tm)
        nm = Mp // tm

    x2d = x.reshape(M, H)
    if Mp != M:
        x2d = jnp.pad(x2d, ((0, Mp - M), (0, 0)))

    wbytes = jnp.dtype(prepped["wgu"].dtype).itemsize
    xbytes = jnp.dtype(x2d.dtype).itemsize
    # Per-step VMEM: double-buffered inputs + (conservatively) 2x f32 out block.
    est = 2 * (tm * H * xbytes + H * 2 * ti * wbytes + ti * H * wbytes
               + tm * H * 4)
    vmem_limit = int(min(max(2 * est, 32 * 2**20), cfg["vmem_cap"]))

    cost = pl.CostEstimate(
        flops=int(6 * Mp * H * Ip),
        transcendentals=int(Mp * Ip),
        # Weights (gate|up + down) are re-streamed once per row tile.
        bytes_accessed=int(nm * 3 * H * Ip * wbytes + Mp * H * (xbytes + 4)),
    )

    kernel = functools.partial(_mlp_kernel, ti=ti)

    out2d = pl.pallas_call(
        kernel,
        out_shape=jax.ShapeDtypeStruct((Mp, H), jnp.float32),
        grid_spec=pltpu.PrefetchScalarGridSpec(
            num_scalar_prefetch=0,
            grid=(nm, nk),                                     # (rows, I-reduction)
            in_specs=[
                pl.BlockSpec((tm, H), lambda i, k: (i, 0)),            # x rows (f32)
                pl.BlockSpec((None, H, 2 * ti), lambda i, k: (k, 0, 0)),  # [gate|up] slab
                pl.BlockSpec((None, ti, H), lambda i, k: (k, 0, 0)),      # down slab
            ],
            out_specs=pl.BlockSpec((tm, H), lambda i, k: (i, 0)),
        ),
        compiler_params=pltpu.CompilerParams(
            dimension_semantics=("parallel", "arbitrary"),
            vmem_limit_bytes=vmem_limit,
        ),
        cost_estimate=cost,
    )(x2d, prepped["wgu"], prepped["wd"])

    if Mp != M:
        out2d = out2d[:M]
    return out2d.reshape(B, S, H).astype(x.dtype)


# ----------------------------- reference (JAX) --------------------------------

def qwen2_mlp_ref(x, params, *, use_lora, r=8, lora_alpha=32):
    """Pure f32 reference matching the PyTorch module's forward."""
    def lin(v, w, A=None, Bm=None):
        out = v @ w.T
        if use_lora:
            out = out + (v @ A.T @ Bm.T) * (lora_alpha / r)
        return out

    gate = lin(x, params["gate_w"], params.get("gate_A"), params.get("gate_B"))
    up = lin(x, params["up_w"], params.get("up_A"), params.get("up_B"))
    return (jax.nn.silu(gate) * up) @ params["down_w"].T


# --------------------------------- main ---------------------------------------

if __name__ == "__main__":
    B, S = 2, 8
    hidden_size = 64
    intermediate_size = 128
    r, lora_alpha = 8, 32

    key = jax.random.PRNGKey(0)
    ks = jax.random.split(key, 8)

    def uniform_init(k, shape, fan_in):
        bound = 1.0 / jnp.sqrt(fan_in)
        return jax.random.uniform(k, shape, jnp.float32, -bound, bound)

    params = {
        # nn.Linear weights: (out_features, in_features)
        "gate_w": uniform_init(ks[0], (intermediate_size, hidden_size), hidden_size),
        "up_w":   uniform_init(ks[1], (intermediate_size, hidden_size), hidden_size),
        "down_w": uniform_init(ks[2], (hidden_size, intermediate_size), intermediate_size),
        # LoRA params (A: (r, in), B: (out, r)).  Module inits B to zeros; use
        # small random values so the LoRA path actually contributes.
        "gate_A": uniform_init(ks[3], (r, hidden_size), hidden_size),
        "gate_B": 0.01 * jax.random.normal(ks[4], (intermediate_size, r), jnp.float32),
        "up_A":   uniform_init(ks[5], (r, hidden_size), hidden_size),
        "up_B":   0.01 * jax.random.normal(ks[6], (intermediate_size, r), jnp.float32),
    }

    x = jax.random.normal(ks[7], (B, S, hidden_size), jnp.float32)

    # LoRA path (ENABLE_LORA=True, use_lora=True).
    prepped_lora = prepare_qwen2_mlp_params(params, use_lora=True,
                                            r=r, lora_alpha=lora_alpha)
    out = jax.block_until_ready(qwen2_mlp(x, prepped_lora))
    ref = qwen2_mlp_ref(x, params, use_lora=True, r=r, lora_alpha=lora_alpha)
    assert out.shape == (B, S, hidden_size)
    # bf16 matmuls (f32 accumulate) vs f32 reference -> relaxed tolerance.
    assert jnp.allclose(out, ref, rtol=3e-2, atol=3e-2), "LoRA path mismatch"

    # Plain Qwen2MLP path (use_lora=False).
    prepped_plain = prepare_qwen2_mlp_params(params, use_lora=False)
    out_plain = jax.block_until_ready(qwen2_mlp(x, prepped_plain))
    ref_plain = qwen2_mlp_ref(x, params, use_lora=False)
    assert jnp.allclose(out_plain, ref_plain, rtol=3e-2, atol=3e-2), "plain path mismatch"

    print("KERNEL_OK")
</pallas_src>

<mosaic_0001>
module attributes {stable_mosaic.version = 11 : i64} {
  func.func @_mlp_kernel(%arg0: i32, %arg1: i32, %arg2: memref<16x64xf32, #tpu.memory_space<vmem>>, %arg3: memref<1x64x256xbf16, #tpu.memory_space<vmem>>, %arg4: memref<1x128x64xbf16, #tpu.memory_space<vmem>>, %arg5: memref<16x64xf32, #tpu.memory_space<vmem>>) attributes {dimension_semantics = [#tpu.dimension_semantics<parallel>, #tpu.dimension_semantics<arbitrary>], iteration_bounds = array<i64: 1, 1>, scalar_prefetch = 0 : i64, scratch_operands = 0 : i64, tpu.core_type = #tpu.core_type<tc>, window_params = [{transform_indices = @transform_0, window_bounds = array<i64: 16, 64>}, {transform_indices = @transform_1, window_bounds = array<i64: 1, 64, 256>}, {transform_indices = @transform_2, window_bounds = array<i64: 1, 128, 64>}, {transform_indices = @transform_3, window_bounds = array<i64: 16, 64>}]} {
    %c0 = arith.constant 0 : index
    %c0_0 = arith.constant 0 : index
    %0 = vector.load %arg2[%c0, %c0_0] : memref<16x64xf32, #tpu.memory_space<vmem>>, vector<16x64xf32>
    %1 = arith.truncf %0 : vector<16x64xf32> to vector<16x64xbf16>
    %c0_1 = arith.constant 0 : index
    %c0_2 = arith.constant 0 : index
    %c0_3 = arith.constant 0 : index
    %2 = vector.load %arg3[%c0_1, %c0_2, %c0_3] : memref<1x64x256xbf16, #tpu.memory_space<vmem>>, vector<1x64x256xbf16>
    %3 = vector.shape_cast %2 : vector<1x64x256xbf16> to vector<64x256xbf16>
    %cst = arith.constant dense<0.000000e+00> : vector<16x256xf32>
    %4 = tpu.matmul %1, %3, %cst {dimension_numbers = #tpu.dot_dimension_numbers<[1], [0], [0], [1], [0, 0, 1, 1], [], []>} : vector<16x64xbf16>, vector<64x256xbf16>, vector<16x256xf32> -> vector<16x256xf32>
    %5 = vector.extract_strided_slice %4 {offsets = [0, 0], sizes = [16, 128], strides = [1, 1]} : vector<16x256xf32> to vector<16x128xf32>
    %6 = vector.extract_strided_slice %4 {offsets = [0, 128], sizes = [16, 128], strides = [1, 1]} : vector<16x256xf32> to vector<16x128xf32>
    %7 = arith.negf %5 : vector<16x128xf32>
    %8 = math.exp %7 : vector<16x128xf32>
    %cst_4 = arith.constant 1.000000e+00 : f32
    %9 = vector.broadcast %cst_4 : f32 to vector<16x128xf32>
    %10 = arith.addf %9, %8 : vector<16x128xf32>
    %11 = arith.divf %9, %10 : vector<16x128xf32>
    %12 = arith.mulf %5, %11 : vector<16x128xf32>
    %13 = arith.mulf %12, %6 : vector<16x128xf32>
    %14 = arith.truncf %13 : vector<16x128xf32> to vector<16x128xbf16>
    %c0_5 = arith.constant 0 : index
    %c0_6 = arith.constant 0 : index
    %c0_7 = arith.constant 0 : index
    %15 = vector.load %arg4[%c0_5, %c0_6, %c0_7] : memref<1x128x64xbf16, #tpu.memory_space<vmem>>, vector<1x128x64xbf16>
    %16 = vector.shape_cast %15 : vector<1x128x64xbf16> to vector<128x64xbf16>
    %cst_8 = arith.constant dense<0.000000e+00> : vector<16x64xf32>
    %17 = tpu.matmul %14, %16, %cst_8 {dimension_numbers = #tpu.dot_dimension_numbers<[1], [0], [0], [1], [0, 0, 1, 1], [], []>} : vector<16x128xbf16>, vector<128x64xbf16>, vector<16x64xf32> -> vector<16x64xf32>
    %c0_i32 = arith.constant 0 : i32
    %18 = arith.cmpi eq, %arg1, %c0_i32 : i32
    %19 = arith.extui %18 : i1 to i32
    %c0_i32_9 = arith.constant 0 : i32
    %20 = arith.cmpi ne, %19, %c0_i32_9 : i32
    scf.if %20 {
      %c0_12 = arith.constant 0 : index
      %c0_13 = arith.constant 0 : index
      %24 = vector.load %arg5[%c0_12, %c0_13] : memref<16x64xf32, #tpu.memory_space<vmem>>, vector<16x64xf32>
      tpu.vector_store %arg5[%c0_12, %c0_13], %17 {strides = array<i32>} : memref<16x64xf32, #tpu.memory_space<vmem>>, vector<16x64xf32>,
    } else {
    }
    %c0_i32_10 = arith.constant 0 : i32
    %21 = arith.cmpi sgt, %arg1, %c0_i32_10 : i32
    %22 = arith.extui %21 : i1 to i32
    %c0_i32_11 = arith.constant 0 : i32
    %23 = arith.cmpi ne, %22, %c0_i32_11 : i32
    scf.if %23 {
      %c0_12 = arith.constant 0 : index
      %c0_13 = arith.constant 0 : index
      %24 = vector.load %arg5[%c0_12, %c0_13] : memref<16x64xf32, #tpu.memory_space<vmem>>, vector<16x64xf32>
      %25 = arith.addf %24, %17 : vector<16x64xf32>
      %c0_14 = arith.constant 0 : index
      %c0_15 = arith.constant 0 : index
      %26 = vector.load %arg5[%c0_14, %c0_15] : memref<16x64xf32, #tpu.memory_space<vmem>>, vector<16x64xf32>
      tpu.vector_store %arg5[%c0_14, %c0_15], %25 {strides = array<i32>} : memref<16x64xf32, #tpu.memory_space<vmem>>, vector<16x64xf32>,
    } else {
    }
    return
  }
  func.func @transform_0(%arg0: i32, %arg1: i32) -> (i32, i32) {
    %c0_i32 = arith.constant 0 : i32
    %c0_i32_0 = arith.constant 0 : i32
    return %arg0, %c0_i32 : i32, i32
  }
  func.func @transform_1(%arg0: i32, %arg1: i32) -> (i32, i32, i32) {
    %c0_i32 = arith.constant 0 : i32
    %c0_i32_0 = arith.constant 0 : i32
    %c0_i32_1 = arith.constant 0 : i32
    return %arg1, %c0_i32, %c0_i32_0 : i32, i32, i32
  }
  func.func @transform_2(%arg0: i32, %arg1: i32) -> (i32, i32, i32) {
    %c0_i32 = arith.constant 0 : i32
    %c0_i32_0 = arith.constant 0 : i32
    %c0_i32_1 = arith.constant 0 : i32
    return %arg1, %c0_i32, %c0_i32_0 : i32, i32, i32
  }
  func.func @transform_3(%arg0: i32, %arg1: i32) -> (i32, i32) {
    %c0_i32 = arith.constant 0 : i32
    %c0_i32_0 = arith.constant 0 : i32
    return %arg0, %c0_i32 : i32, i32
  }
}

</mosaic_0001>

<llo_original>
// kernel: tpu_custom_call.1
$region0: #{tpu_custom_call.1}
  #allocation0 [shape = 'u32[]', space=smem, size = 0x4, offset = 0x4, fixed_abs, tag = 'smem constant byte address 0x4 - core index']
  #allocation1 [shape = 'u32[144,128]{1,0:T(1,128)}', space=vmem, size = 0x12000, scoped, tag = 'internal scratch']
  %s0 = inlined_call_operand.vmem [shape: f32[16,64], index: 0, kind: input, shape index: {}]
  %s1 = inlined_call_operand.vmem [shape: bf16[1,64,256], index: 1, kind: input, shape index: {}]
  %s2 = inlined_call_operand.vmem [shape: bf16[1,128,64], index: 2, kind: input, shape index: {}]
  %s3 = inlined_call_operand.hbm [shape: f32[16,64], index: 3, kind: output, shape index: {}]
  %s4 = sld [smem:[#allocation0]]
  $region30: #{tpu_custom_call.1} parent=0
    _
  %s6 = ssub.s32 1, %s4
  %s7 = scalar_select 0, %s6, %s4
  $region1: #{tpu_custom_call.1} parent=0
    #allocation2 [shape = 'u8[8192]{0}', space=vmem, size = 0x2000, scoped, tag = 'output window, operand 0, single buffered']
    #allocation3 [shape = 's32[1]{0}', space=sflag, size = 0x4, scoped, tag = 'scoped memory for tpu_custom_call.1']
    %8 = vsyncpa [#allocation3], 0
    // Predicated region
    $region2: #{tpu_custom_call.1} parent=1 // pred_check
      _
    $region3: #{tpu_custom_call.1} parent=1 // pred_check_branch
      %10 = sbr.rel (0) target = $region5
    $region4: #{tpu_custom_call.1} parent=1 // pred_region
      _
    $region5: #{tpu_custom_call.1} parent=1 // pred_fallthru
      _
    // Predicated region
    $region6: #{tpu_custom_call.1} parent=1 // pred_check
      _
    $region7: #{tpu_custom_call.1} parent=1 // pred_check_branch
      %12 = sbr.rel (0) target = $region9
    $region8: #{tpu_custom_call.1} parent=1 // pred_region
      _
    $region9: #{tpu_custom_call.1} parent=1 // pred_fallthru
      _
    // Predicated region
    $region10: #{tpu_custom_call.1} parent=1 // pred_check
      _
    $region11: #{tpu_custom_call.1} parent=1 // pred_check_branch
      %14 = sbr.rel (0) target = $region13
    $region12: #{tpu_custom_call.1} parent=1 // pred_region
      _
    $region13: #{tpu_custom_call.1} parent=1 // pred_fallthru
      _
    %v16 = vld [vmem:[%s0] sm:$0xff]
    %v17 = vld [vmem:[%s0 + $0x8] sm:$0xff]
    %v18 = vpack.c.bf16 %v17, %v16
    %v19 = vld [vmem:[%s1] sm:$0xff]
    %v20 = vld [vmem:[%s1 + $0x8] sm:$0xff]
    %v21 = vld [vmem:[%s1 + $0x10] sm:$0xff]
    %v22 = vld [vmem:[%s1 + $0x18] sm:$0xff]
    %v23 = vld [vmem:[%s1 + $0x20] sm:$0xff]
    %v24 = vld [vmem:[%s1 + $0x28] sm:$0xff]
    %v25 = vld [vmem:[%s1 + $0x30] sm:$0xff]
    %v26 = vld [vmem:[%s1 + $0x38] sm:$0xff]
    %v35 = vunpack.c.l.b16 %v19
    %v36 = vunpack.c.h.b16 %v19
    %v37 = vunpack.c.l.b16 %v20
    %v38 = vunpack.c.h.b16 %v20
    %v39 = vunpack.c.l.b16 %v21
    %v40 = vunpack.c.h.b16 %v21
    %v41 = vunpack.c.l.b16 %v22
    %v42 = vunpack.c.h.b16 %v22
    %v43 = vunpack.c.l.b16 %v23
    %v44 = vunpack.c.h.b16 %v23
    %v45 = vunpack.c.l.b16 %v24
    %v46 = vunpack.c.h.b16 %v24
    %v47 = vunpack.c.l.b16 %v25
    %v48 = vunpack.c.h.b16 %v25
    %v49 = vunpack.c.l.b16 %v26
    %v50 = vunpack.c.h.b16 %v26
    %v51 = vpack.c.b16 %v37, %v35
    %v52 = vpack.c.b16 %v38, %v36
    %v53 = vpack.c.b16 %v41, %v39
    %v54 = vpack.c.b16 %v42, %v40
    %v55 = vpack.c.b16 %v45, %v43
    %v56 = vpack.c.b16 %v46, %v44
    %v57 = vpack.c.b16 %v49, %v47
    %v58 = vpack.c.b16 %v50, %v48
    %vm67 = vcmask 523264
    %v69 = vsel %vm67, %v18, 0
    %71 = vmatprep.subr.bf16.mxu0 0
    %72 = vmatpush1.bf16.msra.mxu0 0
    %73 = vmatprep.subr.bf16.mxu0 0
    %74 = vmatpush1.bf16.msra.mxu0 0
    %75 = vmatprep.subr.bf16.mxu0 0
    %76 = vmatpush1.bf16.msra.mxu0 0
    %77 = vmatprep.subr.bf16.mxu0 0
    %78 = vmatpush1.bf16.msra.mxu0 0
    %79 = vmatprep.subr.bf16.mxu0 %v58
    %80 = vmatpush1.bf16.msra.mxu0 %v57
    %81 = vmatprep.subr.bf16.mxu0 %v56
    %82 = vmatpush1.bf16.msra.mxu0 %v55
    %83 = vmatprep.subr.bf16.mxu0 %v54
    %84 = vmatpush1.bf16.msra.mxu0 %v53
    %85 = vmatprep.subr.bf16.mxu0 %v52
    %86 = vmatpush1.bf16.msra.mxu0 %v51
    %87 = vmatprep.subr.bf16.mxu0 0
    %88 = vmatpush2.bf16.msra.mxu0 0
    %89 = vmatprep.subr.bf16.mxu0 0
    %90 = vmatpush2.bf16.msra.mxu0 0
    %91 = vmatprep.subr.bf16.mxu0 0
    %92 = vmatpush2.bf16.msra.mxu0 0
    %93 = vmatprep.subr.bf16.mxu0 0
    %94 = vmatpush2.bf16.msra.mxu0 0
    %95 = vmatprep.subr.bf16.mxu0 0
    %96 = vmatpush2.bf16.msra.mxu0 0
    %97 = vmatprep.subr.bf16.mxu0 0
    %98 = vmatpush2.bf16.msra.mxu0 0
    %99 = vmatprep.subr.bf16.mxu0 0
    %100 = vmatpush2.bf16.msra.mxu0 0
    %101 = vmatprep.subr.bf16.mxu0 0
    %102 = vmatpush2.bf16.msra.mxu0 0
    %103 = vmatprep.mubr.bf16.mxu0 0
    %104 = vmatmul.mubr.bf16.gmra.mxu0 %v69
    %v105 = vpop.f32.mrf.mxu0
    %v106 = vadd.f32 0.0, %v105
    %v107 = vpop.f32.mrf.mxu0
    %v108 = vadd.f32 0.0, %v107
    %v109 = vpop.f32.mrf.mxu0
    %v110 = vadd.f32 0.0, %v109
    %v111 = vpop.f32.mrf.mxu0
    %v112 = vadd.f32 0.0, %v111
    %113 = vdwg.mxu0
    %v114 = vxor.u32 %v106, 2147483648
    %v115 = vxor.u32 %v110, 2147483648
    %v116 = vmul.f32 %v114, 1.442695
    %v117 = vpow.pop %v116
    %v118 = vmul.f32 %v115, 1.442695
    %v119 = vpow.pop %v118
    %v120 = vadd.f32 %v117, 1.0
    %v121 = vadd.f32 %v119, 1.0
    %v122 = vrcp.pop %v120
    %v123 = vmul.f32 1.0, %v122
    %v124 = vrcp.pop %v121
    %v125 = vmul.f32 1.0, %v124
    %v126 = vmul.f32 %v106, %v123
    %v127 = vmul.f32 %v110, %v125
    %v128 = vmul.f32 %v126, %v108
    %v129 = vmul.f32 %v127, %v112
    %v130 = vpack.c.bf16 %v129, %v128
    %v131 = vld [vmem:[%s2] sm:$0xf]
    %v132 = vld [vmem:[%s2 + $0x4] sm:$0xf]
    %v133 = vld [vmem:[%s2 + $0x8] sm:$0xf]
    %v134 = vld [vmem:[%s2 + $0xc] sm:$0xf]
    %v135 = vld [vmem:[%s2 + $0x10] sm:$0xf]
    %v136 = vld [vmem:[%s2 + $0x14] sm:$0xf]
    %v137 = vld [vmem:[%s2 + $0x18] sm:$0xf]
    %v138 = vld [vmem:[%s2 + $0x1c] sm:$0xf]
    %v139 = vld [vmem:[%s2 + $0x20] sm:$0xf]
    %v140 = vld [vmem:[%s2 + $0x24] sm:$0xf]
    %v141 = vld [vmem:[%s2 + $0x28] sm:$0xf]
    %v142 = vld [vmem:[%s2 + $0x2c] sm:$0xf]
    %v143 = vld [vmem:[%s2 + $0x30] sm:$0xf]
    %v144 = vld [vmem:[%s2 + $0x34] sm:$0xf]
    %v145 = vld [vmem:[%s2 + $0x38] sm:$0xf]
    %v146 = vld [vmem:[%s2 + $0x3c] sm:$0xf]
    %v163 = vunpack.c.l.b16 %v131
    %v164 = vunpack.c.l.b16 %v132
    %v165 = vunpack.c.l.b16 %v133
    %v166 = vunpack.c.l.b16 %v134
    %v167 = vunpack.c.l.b16 %v135
    %v168 = vunpack.c.l.b16 %v136
    %v169 = vunpack.c.l.b16 %v137
    %v170 = vunpack.c.l.b16 %v138
    %v171 = vunpack.c.l.b16 %v139
    %v172 = vunpack.c.l.b16 %v140
    %v173 = vunpack.c.l.b16 %v141
    %v174 = vunpack.c.l.b16 %v142
    %v175 = vunpack.c.l.b16 %v143
    %v176 = vunpack.c.l.b16 %v144
    %v177 = vunpack.c.l.b16 %v145
    %v178 = vunpack.c.l.b16 %v146
    %v179 = vpack.c.b16 %v164, %v163
    %v180 = vpack.c.b16 %v166, %v165
    %v181 = vpack.c.b16 %v168, %v167
    %v182 = vpack.c.b16 %v170, %v169
    %v183 = vpack.c.b16 %v172, %v171
    %v184 = vpack.c.b16 %v174, %v173
    %v185 = vpack.c.b16 %v176, %v175
    %v186 = vpack.c.b16 %v178, %v177
    %195 = vmatprep.subr.bf16.mxu0 0
    %196 = vmatpush1.bf16.msra.mxu0 %v186
    %197 = vmatprep.subr.bf16.mxu0 0
    %198 = vmatpush1.bf16.msra.mxu0 %v185
    %199 = vmatprep.subr.bf16.mxu0 0
    %200 = vmatpush1.bf16.msra.mxu0 %v184
    %201 = vmatprep.subr.bf16.mxu0 0
    %202 = vmatpush1.bf16.msra.mxu0 %v183
    %203 = vmatprep.subr.bf16.mxu0 0
    %204 = vmatpush1.bf16.msra.mxu0 %v182
    %205 = vmatprep.subr.bf16.mxu0 0
    %206 = vmatpush1.bf16.msra.mxu0 %v181
    %207 = vmatprep.subr.bf16.mxu0 0
    %208 = vmatpush1.bf16.msra.mxu0 %v180
    %209 = vmatprep.subr.bf16.mxu0 0
    %210 = vmatpush1.bf16.msra.mxu0 %v179
    %211 = vmatprep.subr.bf16.mxu0 0
    %212 = vmatpush2.bf16.msra.mxu0 0
    %213 = vmatprep.subr.bf16.mxu0 0
    %214 = vmatpush2.bf16.msra.mxu0 0
    %215 = vmatprep.subr.bf16.mxu0 0
    %216 = vmatpush2.bf16.msra.mxu0 0
    %217 = vmatprep.subr.bf16.mxu0 0
    %218 = vmatpush2.bf16.msra.mxu0 0
    %219 = vmatprep.subr.bf16.mxu0 0
    %220 = vmatpush2.bf16.msra.mxu0 0
    %221 = vmatprep.subr.bf16.mxu0 0
    %222 = vmatpush2.bf16.msra.mxu0 0
    %223 = vmatprep.subr.bf16.mxu0 0
    %224 = vmatpush2.bf16.msra.mxu0 0
    %225 = vmatprep.subr.bf16.mxu0 0
    %226 = vmatpush2.bf16.msra.mxu0 0
    %227 = vmatprep.mubr.bf16.mxu0 0
    %228 = vmatmul.mubr.bf16.gmra.mxu0 %v130
    %v229 = vpop.f32.mrf.mxu0
    %v230 = vadd.f32 0.0, %v229
    %v231 = vpop.f32.mrf.mxu0
    %v232 = vpop.f32.mrf.mxu0
    %v233 = vadd.f32 0.0, %v232
    %v234 = vpop.f32.mrf.mxu0
    %235 = vdwg.mxu0
    %p236 = scmp.eq.s32.totalorder 0, 0
    // Predicated region
    $region14: #{tpu_custom_call.1} parent=1 // pred_check
      %p237 = pneg %p236
    $region15: #{tpu_custom_call.1} parent=1 // pred_check_branch
      %239 = sbr.rel (%p237) target = $region17
    $region16: #{tpu_custom_call.1} parent=1 // pred_region
      %240 = vst.msk [vmem:[#allocation2] sm:$0xff] %vm67, %v230
      %241 = vst.msk [vmem:[#allocation2 + $0x8] sm:$0xff] %vm67, %v233
    $region17: #{tpu_custom_call.1} parent=1 // pred_fallthru
      _
    %p242 = scmp.gt.s32.totalorder 0, 0
    // Predicated region
    $region18: #{tpu_custom_call.1} parent=1 // pred_check
      %p243 = pneg %p242
    $region19: #{tpu_custom_call.1} parent=1 // pred_check_branch
      %245 = sbr.rel (%p243) target = $region21
    $region20: #{tpu_custom_call.1} parent=1 // pred_region
      %v246 = vld [vmem:[#allocation2] sm:$0xff]
      %v247 = vld [vmem:[#allocation2 + $0x8] sm:$0xff]
      %v248 = vadd.f32 %v246, %v230
      %v249 = vadd.f32 %v247, %v233
      %250 = vst.msk [vmem:[#allocation2] sm:$0xff] %vm67, %v248
      %251 = vst.msk [vmem:[#allocation2 + $0x8] sm:$0xff] %vm67, %v249
    $region21: #{tpu_custom_call.1} parent=1 // pred_fallthru
      _
    // Predicated region
    $region22: #{tpu_custom_call.1} parent=1 // pred_check
      _
    $region23: #{tpu_custom_call.1} parent=1 // pred_check_branch
      %253 = sbr.rel (0) target = $region25
    $region24: #{tpu_custom_call.1} parent=1 // pred_region
      %s255 = ssub.s32 256, 256
      %256 = vsyncadd [#allocation3], %s255
      %s257 = sshll.u32 [#allocation2], 4
      %s258 = int_to_ptr.vmem [resolvable:$true] %s257
      %263 = dma.vmem_to_hbm [thread:$0]  %s258, 256, %s3, [#allocation3], 128, 128, 8
    $region25: #{tpu_custom_call.1} parent=1 // pred_fallthru
      _
    // Predicated region
    $region26: #{tpu_custom_call.1} parent=1 // pred_check
      _
    $region27: #{tpu_custom_call.1} parent=1 // pred_check_branch
      %265 = sbr.rel (0) target = $region29
    $region28: #{tpu_custom_call.1} parent=1 // pred_region
      %266 = dma.done [#allocation3], 256
    $region29: #{tpu_custom_call.1} parent=1 // pred_fallthru
      _
    %267 = vsyncpa [#allocation3], 1

</llo_original>
